<compile_context>
chip_gen: v6e
topology: v6e:2x2x1
jax: 0.10.0
libtpu: 0.0.40
codegen_flags: <defaults>
</compile_context>

<pallas_src>
import functools

import jax
import jax.numpy as jnp
from jax.experimental import pallas as pl
from jax.experimental.pallas import tpu as pltpu


def _round_up(x: int, m: int) -> int:
    return ((x + m - 1) // m) * m


# ---------------------------------------------------------------------------
# One-off capability probe: can Mosaic lower (rows, C) -> (rows*C/128, 128)
# (a sublane->lane relayout) inside a kernel, with correct row-major values?
# ---------------------------------------------------------------------------
@functools.lru_cache(maxsize=None)
def _dense_reshape_supported(c: int) -> bool:
    rows = 1024                      # rows * c is a multiple of 128 for any c
    if c <= 0 or (rows * c) % 128 != 0:
        return False

    def probe(x_ref, o_ref):
        o_ref[...] = x_ref[...].reshape(o_ref.shape)

    try:
        x = jnp.arange(rows * c, dtype=jnp.float32).reshape(rows, c)
        out = pl.pallas_call(
            probe,
            out_shape=jax.ShapeDtypeStruct((rows * c // 128, 128), jnp.float32),
        )(x)
        out = jax.block_until_ready(out)
        return bool(jnp.array_equal(out.reshape(rows, c), x))
    except Exception:
        return False


# ---------------------------------------------------------------------------
# Kernel
# ---------------------------------------------------------------------------
def _make_kernel(*, tm: int, n_rows: int, dense: bool):
    def kernel(x_ref, wt_ref, t_ref, logits_ref, lsum_ref):
        # x_ref:      (tm, F)  f32    feature tile (ragged-tail rows = garbage)
        # wt_ref:     (F, C)   f32    Linear weight, transposed
        # t_ref:      (tm, 1)  int32  class indices
        # logits_ref: (tm*C/128, 128) f32 (dense) or (tm, C) f32 (fallback)
        # lsum_ref:   (1, 8, 128) f32 per-tile partial sum of the NLL
        logits = jnp.dot(x_ref[...], wt_ref[...],
                         preferred_element_type=jnp.float32)          # (tm, C)

        if dense:
            # Lane-dense relayout before the store; undone by a free row-major
            # reshape in the wrapper.  The repack rides the XLU, which has
            # slack here, and turns the dominant output stream into unmasked
            # full-lane stores + dense DMA.
            logits_ref[...] = logits.reshape(logits_ref.shape)
        else:
            logits_ref[...] = logits

        # Per-row cross entropy = logsumexp(logits) - logits[target]
        m = jnp.max(logits, axis=-1, keepdims=True)                   # (tm, 1)
        lse = m + jnp.log(jnp.sum(jnp.exp(logits - m), axis=-1, keepdims=True))
        cls = jax.lax.broadcasted_iota(jnp.int32, logits.shape, 1)    # (tm, C)
        onehot = (cls == t_ref[...]).astype(jnp.float32)
        tgt = jnp.sum(logits * onehot, axis=-1, keepdims=True)        # (tm, 1)
        nll = lse - tgt                                               # (tm, 1)

        # Mask garbage rows of the ragged last tile (NaN-safe: where() selects
        # 0.0 before any reduction) and reduce to one partial sum per tile.
        row = (pl.program_id(0) * tm
               + jax.lax.broadcasted_iota(jnp.int32, (tm, 1), 0))
        nll = jnp.where(row < n_rows, nll, 0.0)
        lsum_ref[...] = jnp.full(lsum_ref.shape, jnp.sum(nll), jnp.float32)

    return kernel


# ---------------------------------------------------------------------------
# Single-tensor fused Linear + cross-entropy
# ---------------------------------------------------------------------------
def _head_logits_and_loss_sum(x, t, wt, *, tm_max=8192, min_tiles=4,
                              dense_ok=False):
    """Returns (logits (n, C) f32, sum_i CE(logits_i, t_i) scalar f32)."""
    n, f = x.shape
    c = wt.shape[1]

    # Row tile: multiple of 128, capped by tm_max, and small enough to keep
    # >= min_tiles grid steps so the single "parallel" axis spans both v7x
    # TensorCores with a couple of pipeline stages each.
    tm = min(tm_max, _round_up(pl.cdiv(n, min_tiles), 128))
    tm = _round_up(tm, 128)
    grid = pl.cdiv(n, tm)

    dense = (dense_ok and c % 128 != 0 and (tm * c) % 128 == 0
             and ((tm * c) // 128) % 8 == 0)
    if dense:
        logits_shape = (pl.cdiv(n * c, 128), 128)
        logits_spec = pl.BlockSpec(((tm * c) // 128, 128), lambda i: (i, 0))
    else:
        logits_shape = (n, c)
        logits_spec = pl.BlockSpec((tm, c), lambda i: (i, 0))

    kernel = _make_kernel(tm=tm, n_rows=n, dense=dense)
    logits_out, loss_tiles = pl.pallas_call(
        kernel,
        out_shape=(
            jax.ShapeDtypeStruct(logits_shape, jnp.float32),
            jax.ShapeDtypeStruct((grid, 8, 128), jnp.float32),
        ),
        grid_spec=pltpu.PrefetchScalarGridSpec(
            num_scalar_prefetch=0,
            grid=(grid,),
            in_specs=[
                pl.BlockSpec((tm, f), lambda i: (i, 0)),   # features (ragged ok)
                pl.BlockSpec((f, c), lambda i: (0, 0)),    # weight (resident)
                pl.BlockSpec((tm, 1), lambda i: (i, 0)),   # targets
            ],
            out_specs=(
                logits_spec,
                pl.BlockSpec((1, 8, 128), lambda i: (i, 0, 0)),
            ),
        ),
        compiler_params=pltpu.CompilerParams(
            # Independent row tiles -> shardable across v7x's two TensorCores.
            dimension_semantics=("parallel",),
            # Narrow (lane-padded) feature/target blocks make the real
            # double-buffered footprint ~24 MiB at tm=8192; raise v5e's 16 MiB
            # default scoped limit, stay well under v7x's 64 MiB physical.
            vmem_limit_bytes=48 * 1024 * 1024,
        ),
    )(x, wt, t.reshape(-1, 1).astype(jnp.int32))

    if dense:
        logits = logits_out.reshape(-1)[: n * c].reshape(n, c)
    else:
        logits = logits_out
    loss_sum = loss_tiles[:, 0, 0].sum()
    return logits, loss_sum


# ---------------------------------------------------------------------------
# Module wrapper
# ---------------------------------------------------------------------------
class SemanticHeadLossPallas:
    """Pallas/JAX equivalent of SemanticHeadLoss (class_weights_file=None)."""

    def __init__(self, num_classes, loss_weight=1.0, f_maps=32, key=None,
                 tm_max=8192):
        if key is None:
            key = jax.random.PRNGKey(0)
        self.loss_weight = jnp.float32(loss_weight)
        self.tm_max = tm_max
        # nn.Linear(f_maps, num_classes, bias=False) default init:
        # U(-1/sqrt(F), 1/sqrt(F)); weight shape (C, F).
        bound = 1.0 / (f_maps ** 0.5)
        self.weight = jax.random.uniform(
            key, (num_classes, f_maps), jnp.float32, -bound, bound)
        # Hoisted once: transposed f32 copy fed to the kernel, shape (F, C).
        self.wt = jnp.asarray(self.weight.T)
        # One-off probe for the lane-dense logits relayout (cached per C).
        self._dense_ok = _dense_reshape_supported(int(num_classes))

    def __call__(self, features, targets):
        logits_list, losses = [], []
        for x, t in zip(features, targets):
            n = int(x.shape[0])
            logits, nll_sum = _head_logits_and_loss_sum(
                jnp.asarray(x, jnp.float32), jnp.asarray(t), self.wt,
                tm_max=self.tm_max, dense_ok=self._dense_ok)
            logits_list.append(logits)
            losses.append(nll_sum / n)     # CrossEntropyLoss reduction='mean'
        loss = self.loss_weight * jnp.stack(losses).sum()
        return loss, logits_list


# ---------------------------------------------------------------------------
# Pure-JAX reference + self-test
# ---------------------------------------------------------------------------
def _reference_forward(features, targets, weight, loss_weight):
    total = jnp.float32(0.0)
    logits_list = []
    for x, t in zip(features, targets):
        logits = jnp.dot(x.astype(jnp.float32), weight.T,
                         preferred_element_type=jnp.float32)
        logp = jax.nn.log_softmax(logits, axis=-1)
        nll = -jnp.take_along_axis(
            logp, t[:, None].astype(jnp.int32), axis=-1)[:, 0]
        total = total + nll.mean()
        logits_list.append(logits)
    return jnp.float32(loss_weight) * total, logits_list


if __name__ == "__main__":
    num_classes = 16
    f_maps = 32
    loss_weight = 2.0

    key = jax.random.PRNGKey(0)
    k_w, k_f1, k_f2, k_f3, k_t1, k_t2, k_t3 = jax.random.split(key, 7)

    # List of per-sample point clouds: (N_i, f_maps) feature matrices; row
    # counts exercise exact tiling (256), a non-multiple-of-8 ragged tail
    # (200), and a single partially filled tile (120).
    features = [
        jax.random.normal(k_f1, (256, f_maps), jnp.float32),
        jax.random.normal(k_f2, (200, f_maps), jnp.float32),
        jax.random.normal(k_f3, (120, f_maps), jnp.float32),
    ]
    targets = [
        jax.random.randint(k_t1, (256,), 0, num_classes, jnp.int32),
        jax.random.randint(k_t2, (200,), 0, num_classes, jnp.int32),
        jax.random.randint(k_t3, (120,), 0, num_classes, jnp.int32),
    ]

    module = SemanticHeadLossPallas(num_classes=num_classes,
                                    loss_weight=loss_weight,
                                    f_maps=f_maps, key=k_w)

    loss, logits_list = module(features, targets)
    loss = jax.block_until_ready(loss)
    logits_list = [jax.block_until_ready(l) for l in logits_list]

    ref_loss, ref_logits = _reference_forward(
        features, targets, module.weight, loss_weight)
    assert jnp.allclose(loss, ref_loss, rtol=1e-3, atol=1e-3), (loss, ref_loss)
    for got, ref in zip(logits_list, ref_logits):
        assert got.shape == ref.shape, (got.shape, ref.shape)
        assert jnp.allclose(got, ref, rtol=1e-3, atol=1e-3)

    print("KERNEL_OK")
</pallas_src>

<mosaic_0001>
module attributes {stable_mosaic.version = 11 : i64} {
  func.func @probe(%arg0: memref<1024x16xf32, #tpu.memory_space<vmem>>, %arg1: memref<128x128xf32, #tpu.memory_space<vmem>>) attributes {dimension_semantics = [], scalar_prefetch = 0 : i64, scratch_operands = 0 : i64, tpu.core_type = #tpu.core_type<tc>} {
    %c0 = arith.constant 0 : index
    %c0_0 = arith.constant 0 : index
    %0 = vector.load %arg0[%c0, %c0_0] : memref<1024x16xf32, #tpu.memory_space<vmem>>, vector<1024x16xf32>
    %1 = vector.shape_cast %0 : vector<1024x16xf32> to vector<128x128xf32>
    %c0_1 = arith.constant 0 : index
    %c0_2 = arith.constant 0 : index
    %2 = vector.load %arg1[%c0_1, %c0_2] : memref<128x128xf32, #tpu.memory_space<vmem>>, vector<128x128xf32>
    tpu.vector_store %arg1[%c0_1, %c0_2], %1 {strides = array<i32>} : memref<128x128xf32, #tpu.memory_space<vmem>>, vector<128x128xf32>,
    return
  }
}

module attributes {stable_mosaic.version = 11 : i64} {
  func.func @kernel(%arg0: i32, %arg1: memref<128x32xf32, #tpu.memory_space<vmem>>, %arg2: memref<32x16xf32, #tpu.memory_space<vmem>>, %arg3: memref<128x1xi32, #tpu.memory_space<vmem>>, %arg4: memref<128x16xf32, #tpu.memory_space<vmem>>, %arg5: memref<1x8x128xf32, #tpu.memory_space<vmem>>) attributes {dimension_semantics = [#tpu.dimension_semantics<parallel>], iteration_bounds = array<i64: 2>, scalar_prefetch = 0 : i64, scratch_operands = 0 : i64, tpu.core_type = #tpu.core_type<tc>, window_params = [{transform_indices = @transform_0, window_bounds = array<i64: 128, 32>}, {pipeline_mode = #tpu.pipeline_mode<synchronous>, transform_indices = @transform_1, window_bounds = array<i64: 32, 16>}, {transform_indices = @transform_2, window_bounds = array<i64: 128, 1>}, {transform_indices = @transform_3, window_bounds = array<i64: 128, 16>}, {transform_indices = @transform_4, window_bounds = array<i64: 1, 8, 128>}]} {
    %c0 = arith.constant 0 : index
    %c0_0 = arith.constant 0 : index
    %0 = vector.load %arg1[%c0, %c0_0] : memref<128x32xf32, #tpu.memory_space<vmem>>, vector<128x32xf32>
    %c0_1 = arith.constant 0 : index
    %c0_2 = arith.constant 0 : index
    %1 = vector.load %arg2[%c0_1, %c0_2] : memref<32x16xf32, #tpu.memory_space<vmem>>, vector<32x16xf32>
    %cst = arith.constant dense<0.000000e+00> : vector<128x16xf32>
    %2 = tpu.matmul %0, %1, %cst {dimension_numbers = #tpu.dot_dimension_numbers<[1], [0], [0], [1], [0, 0, 1, 1], [], []>} : vector<128x32xf32>, vector<32x16xf32>, vector<128x16xf32> -> vector<128x16xf32>
    %c0_3 = arith.constant 0 : index
    %c0_4 = arith.constant 0 : index
    %3 = vector.load %arg4[%c0_3, %c0_4] : memref<128x16xf32, #tpu.memory_space<vmem>>, vector<128x16xf32>
    tpu.vector_store %arg4[%c0_3, %c0_4], %2 {strides = array<i32>} : memref<128x16xf32, #tpu.memory_space<vmem>>, vector<128x16xf32>,
    %cst_5 = arith.constant dense<0xFF800000> : vector<128xf32>
    %4 = vector.multi_reduction <maximumf>, %2, %cst_5 [1] : vector<128x16xf32> to vector<128xf32>
    %5 = vector.shape_cast %4 : vector<128xf32> to vector<128x1xf32>
    %6 = vector.broadcast %5 : vector<128x1xf32> to vector<128x16xf32>
    %7 = arith.subf %2, %6 : vector<128x16xf32>
    %8 = math.exp %7 : vector<128x16xf32>
    %cst_6 = arith.constant dense<0.000000e+00> : vector<128xf32>
    %9 = vector.multi_reduction <add>, %8, %cst_6 [1] : vector<128x16xf32> to vector<128xf32>
    %10 = vector.shape_cast %9 : vector<128xf32> to vector<128x1xf32>
    %11 = math.log %10 : vector<128x1xf32>
    %12 = arith.addf %5, %11 : vector<128x1xf32>
    %13 = tpu.iota {dimensions = array<i32: 1>} : vector<128x16xi32>
    %c0_7 = arith.constant 0 : index
    %c0_8 = arith.constant 0 : index
    %14 = vector.load %arg3[%c0_7, %c0_8] : memref<128x1xi32, #tpu.memory_space<vmem>>, vector<128x1xi32>
    %15 = vector.broadcast %14 : vector<128x1xi32> to vector<128x16xi32>
    %16 = arith.cmpi eq, %13, %15 : vector<128x16xi32>
    %17 = arith.extui %16 : vector<128x16xi1> to vector<128x16xi32>
    %18 = arith.sitofp %17 : vector<128x16xi32> to vector<128x16xf32>
    %19 = arith.mulf %2, %18 : vector<128x16xf32>
    %cst_9 = arith.constant dense<0.000000e+00> : vector<128xf32>
    %20 = vector.multi_reduction <add>, %19, %cst_9 [1] : vector<128x16xf32> to vector<128xf32>
    %21 = vector.shape_cast %20 : vector<128xf32> to vector<128x1xf32>
    %22 = arith.subf %12, %21 : vector<128x1xf32>
    %c128_i32 = arith.constant 128 : i32
    %23 = arith.muli %arg0, %c128_i32 : i32
    %24 = tpu.iota {dimensions = array<i32: 0>} : vector<128x1xi32>
    %25 = vector.broadcast %23 : i32 to vector<128x1xi32>
    %26 = arith.addi %25, %24 : vector<128x1xi32>
    %c256_i32 = arith.constant 256 : i32
    %27 = vector.broadcast %c256_i32 : i32 to vector<128x1xi32>
    %28 = arith.cmpi slt, %26, %27 : vector<128x1xi32>
    %cst_10 = arith.constant 0.000000e+00 : f32
    %29 = vector.broadcast %cst_10 : f32 to vector<128x1xf32>
    %30 = arith.select %28, %22, %29 : vector<128x1xi1>, vector<128x1xf32>
    %31 = vector.shape_cast %30 : vector<128x1xf32> to vector<1x128x1xf32>
    %cst_11 = arith.constant dense<0.000000e+00> : vector<1xf32>
    %32 = vector.multi_reduction <add>, %31, %cst_11 [1, 2] : vector<1x128x1xf32> to vector<1xf32>
    %33 = vector.shape_cast %32 : vector<1xf32> to vector<1x1x1xf32>
    %34 = vector.extract %33[0, 0, 0] : f32 from vector<1x1x1xf32>
    %35 = vector.broadcast %34 : f32 to vector<1x8x128xf32>
    %c0_12 = arith.constant 0 : index
    %c0_13 = arith.constant 0 : index
    %c0_14 = arith.constant 0 : index
    %36 = vector.load %arg5[%c0_12, %c0_13, %c0_14] : memref<1x8x128xf32, #tpu.memory_space<vmem>>, vector<1x8x128xf32>
    tpu.vector_store %arg5[%c0_12, %c0_13, %c0_14], %35 {strides = array<i32>} : memref<1x8x128xf32, #tpu.memory_space<vmem>>, vector<1x8x128xf32>,
    return
  }
  func.func @transform_0(%arg0: i32) -> (i32, i32) {
    %c0_i32 = arith.constant 0 : i32
    %c0_i32_0 = arith.constant 0 : i32
    return %arg0, %c0_i32 : i32, i32
  }
  func.func @transform_1(%arg0: i32) -> (i32, i32) {
    %c0_i32 = arith.constant 0 : i32
    %c0_i32_0 = arith.constant 0 : i32
    %c0_i32_1 = arith.constant 0 : i32
    return %c0_i32, %c0_i32_0 : i32, i32
  }
  func.func @transform_2(%arg0: i32) -> (i32, i32) {
    %c0_i32 = arith.constant 0 : i32
    %c0_i32_0 = arith.constant 0 : i32
    return %arg0, %c0_i32 : i32, i32
  }
  func.func @transform_3(%arg0: i32) -> (i32, i32) {
    %c0_i32 = arith.constant 0 : i32
    %c0_i32_0 = arith.constant 0 : i32
    return %arg0, %c0_i32 : i32, i32
  }
  func.func @transform_4(%arg0: i32) -> (i32, i32, i32) {
    %c0_i32 = arith.constant 0 : i32
    %c0_i32_0 = arith.constant 0 : i32
    %c0_i32_1 = arith.constant 0 : i32
    return %arg0, %c0_i32, %c0_i32_0 : i32, i32, i32
  }
}

</mosaic_0001>

<llo_original>
// kernel: tpu_custom_call.1
$region0: #{tpu_custom_call.1}
  #allocation0 [shape = 'u32[]', space=smem, size = 0x4, offset = 0x4, fixed_abs, tag = 'smem constant byte address 0x4 - core index']
  #allocation1 [shape = 'u32[144,128]{1,0:T(1,128)}', space=vmem, size = 0x12000, scoped, tag = 'internal scratch']
  %s0 = inlined_call_operand.vmem [shape: f32[256,32], index: 0, kind: input, shape index: {}]
  %s1 = inlined_call_operand.vmem [shape: f32[32,16], index: 1, kind: input, shape index: {}]
  %s2 = inlined_call_operand.vmem [shape: s32[256,1], index: 2, kind: input, shape index: {}]
  %s3 = inlined_call_operand.vmem [shape: f32[256,16], index: 3, kind: output, shape index: {0}]
  %s4 = inlined_call_operand.hbm [shape: f32[2,8,128], index: 4, kind: output, shape index: {1}]
  %5 = xla_tuple %s3, %s4
  %s6 = sld [smem:[#allocation0]]
  $region53: #{tpu_custom_call.1} parent=0
    _
  %s8 = ssub.s32 1, %s6
  %s9 = scalar_select 0, %s8, %s6
  $region1: #{tpu_custom_call.1} parent=0
    #allocation2 [shape = 'u8[8192]{0}', space=vmem, size = 0x2000, scoped, tag = 'output window, operand 1']
    #allocation3 [shape = 's32[2]{0}', space=sflag, size = 0x8, scoped, tag = 'scoped memory for tpu_custom_call.1']
    %10 = vsyncpa [#allocation3], 0
    %s11 = scalar_lea.sflag [#allocation3], 1
    %12 = vsyncpa %s11, 0
    loop: start=0, step=1, limit=4
    $region2: #{tpu_custom_call.1} parent=1 // loop_pre_header
      _
    $region3: #{tpu_custom_call.1} parent=1 // loop_header
      %s14 = sphi 0, %s18
      %p15 = scmp.ge.s32.totalorder %s14, 4
      %s24 = sphi 0, %s26
      %s27 = sphi 0, %s24
      %s28 = sphi 0, %s27
      %s44 = sphi 0, %s28
      %s48 = sphi 0, %s48
      %s50 = sphi 0, %s48
      %s51 = sphi 0, %s50
      %s65 = sphi 0, %s51
      %s71 = sphi 0, %s73
      %s74 = sphi 0, %s71
      %s75 = sphi 0, %s74
      %s91 = sphi 0, %s75
      %s97 = sphi 0, %s99
      %s100 = sphi 0, %s97
      %s101 = sphi 0, %s100
      %s117 = sphi 0, %s101
      %s123 = sphi 0, %s125
      %s126 = sphi 0, %s123
      %s127 = sphi 0, %s126
      %s143 = sphi 0, %s127
    $region4: #{tpu_custom_call.1} parent=1 // loop_header_branch
      %17 = sbr.rel (%p15) target = $region8
    $region5: #{tpu_custom_call.1} parent=1 // loop_body
      %s19 = ssub.s32 %s14, 1
      %s20 = ssub.s32 %s14, 2
      %s21 = sadd.s32 %s14, 1
      %s22 = ssub.s32 %s14, %s21
      %p23 = scmp.eq.s32.totalorder %s22, 0
      %s25 = sadd.s32 %s24, 1
      %s26 = scalar_select %p23, %s24, %s25
      %p29 = pneg %p23
      %p30 = scmp.eq.s32.totalorder %s14, 1
      %p31 = por %p29, %p30
      %p32 = scmp.ne.s32.totalorder %s24, %s27
      %p33 = scmp.eq.s32.totalorder %s14, 0
      %p34 = por %p32, %p33
      %p35 = scmp.ne.s32.totalorder %s24, %s27
      %p36 = scmp.eq.s32.totalorder %s19, 1
      %p37 = por %p35, %p36
      %p38 = scmp.ne.s32.totalorder %s27, %s28
      %p39 = scmp.eq.s32.totalorder %s19, 0
      %p40 = por %p38, %p39
      %p41 = scmp.ne.s32.totalorder %s27, %s28
      %p42 = scmp.eq.s32.totalorder %s20, 1
      %p43 = por %p41, %p42
      %p45 = scmp.ne.s32.totalorder %s28, %s44
      %p46 = scmp.eq.s32.totalorder %s20, 0
      %p47 = por %p45, %p46
      %s49 = sadd.s32 %s48, 1
      %p52 = scmp.eq.s32.totalorder %s14, 1
      %p53 = scmp.ne.s32.totalorder %s48, %s50
      %p54 = scmp.eq.s32.totalorder %s14, 0
      %p55 = por %p53, %p54
      %p56 = scmp.ne.s32.totalorder %s48, %s50
      %p57 = scmp.eq.s32.totalorder %s19, 1
      %p58 = por %p56, %p57
      %p59 = scmp.ne.s32.totalorder %s50, %s51
      %p60 = scmp.eq.s32.totalorder %s19, 0
      %p61 = por %p59, %p60
      %p62 = scmp.ne.s32.totalorder %s50, %s51
      %p63 = scmp.eq.s32.totalorder %s20, 1
      %p64 = por %p62, %p63
      %p66 = scmp.ne.s32.totalorder %s51, %s65
      %p67 = scmp.eq.s32.totalorder %s20, 0
      %p68 = por %p66, %p67
      %s69 = ssub.s32 %s14, %s21
      %p70 = scmp.eq.s32.totalorder %s69, 0
      %s72 = sadd.s32 %s71, 1
      %s73 = scalar_select %p70, %s71, %s72
      %p76 = pneg %p70
      %p77 = scmp.eq.s32.totalorder %s14, 1
      %p78 = por %p76, %p77
      %p79 = scmp.ne.s32.totalorder %s71, %s74
      %p80 = scmp.eq.s32.totalorder %s14, 0
      %p81 = por %p79, %p80
      %p82 = scmp.ne.s32.totalorder %s71, %s74
      %p83 = scmp.eq.s32.totalorder %s19, 1
      %p84 = por %p82, %p83
      %p85 = scmp.ne.s32.totalorder %s74, %s75
      %p86 = scmp.eq.s32.totalorder %s19, 0
      %p87 = por %p85, %p86
      %p88 = scmp.ne.s32.totalorder %s74, %s75
      %p89 = scmp.eq.s32.totalorder %s20, 1
      %p90 = por %p88, %p89
      %p92 = scmp.ne.s32.totalorder %s75, %s91
      %p93 = scmp.eq.s32.totalorder %s20, 0
      %p94 = por %p92, %p93
      %s95 = ssub.s32 %s14, %s21
      %p96 = scmp.eq.s32.totalorder %s95, 0
      %s98 = sadd.s32 %s97, 1
      %s99 = scalar_select %p96, %s97, %s98
      %p102 = pneg %p96
      %p103 = scmp.eq.s32.totalorder %s14, 1
      %p104 = por %p102, %p103
      %p105 = scmp.ne.s32.totalorder %s97, %s100
      %p106 = scmp.eq.s32.totalorder %s14, 0
      %p107 = por %p105, %p106
      %p108 = scmp.ne.s32.totalorder %s97, %s100
      %p109 = scmp.eq.s32.totalorder %s19, 1
      %p110 = por %p108, %p109
      %p111 = scmp.ne.s32.totalorder %s100, %s101
      %p112 = scmp.eq.s32.totalorder %s19, 0
      %p113 = por %p111, %p112
      %p114 = scmp.ne.s32.totalorder %s100, %s101
      %p115 = scmp.eq.s32.totalorder %s20, 1
      %p116 = por %p114, %p115
      %p118 = scmp.ne.s32.totalorder %s101, %s117
      %p119 = scmp.eq.s32.totalorder %s20, 0
      %p120 = por %p118, %p119
      %s121 = ssub.s32 %s14, %s21
      %p122 = scmp.eq.s32.totalorder %s121, 0
      %s124 = sadd.s32 %s123, 1
      %s125 = scalar_select %p122, %s123, %s124
      %p128 = pneg %p122
      %p129 = scmp.eq.s32.totalorder %s14, 1
      %p130 = por %p128, %p129
      %p131 = scmp.ne.s32.totalorder %s123, %s126
      %p132 = scmp.eq.s32.totalorder %s14, 0
      %p133 = por %p131, %p132
      %p134 = scmp.ne.s32.totalorder %s123, %s126
      %p135 = scmp.eq.s32.totalorder %s19, 1
      %p136 = por %p134, %p135
      %p137 = scmp.ne.s32.totalorder %s126, %s127
      %p138 = scmp.eq.s32.totalorder %s19, 0
      %p139 = por %p137, %p138
      %p140 = scmp.ne.s32.totalorder %s126, %s127
      %p141 = scmp.eq.s32.totalorder %s20, 1
      %p142 = por %p140, %p141
      %p144 = scmp.ne.s32.totalorder %s127, %s143
      %p145 = scmp.eq.s32.totalorder %s20, 0
      %p146 = por %p144, %p145
      %p147 = scmp.le.s32.totalorder 1, %s14
      %p148 = scmp.lt.s32.totalorder %s14, 3
      %p149 = pnand %p147, %p148
      %p150 = pneg %p149
      // Predicated region
      $region9: #{tpu_custom_call.1} parent=5 // pred_check
        _
      $region10: #{tpu_custom_call.1} parent=5 // pred_check_branch
        %152 = sbr.rel (%p149) target = $region12
      $region11: #{tpu_custom_call.1} parent=5 // pred_region
        %s153 = ssub.s32 %s14, 1
        // Predicated region
        $region13: #{tpu_custom_call.1} parent=11 // pred_check
          %p154 = pneg %p61
        $region14: #{tpu_custom_call.1} parent=11 // pred_check_branch
          %156 = sbr.rel (%p154) target = $region16
        $region15: #{tpu_custom_call.1} parent=11 // pred_region
          _
        $region16: #{tpu_custom_call.1} parent=11 // pred_fallthru
          _
      $region12: #{tpu_custom_call.1} parent=5 // pred_fallthru
        _
      %p157 = scmp.lt.s32.totalorder %s14, 2
      // Predicated region
      $region17: #{tpu_custom_call.1} parent=5 // pred_check
        %p158 = pneg %p157
      $region18: #{tpu_custom_call.1} parent=5 // pred_check_branch
        %160 = sbr.rel (%p158) target = $region20
      $region19: #{tpu_custom_call.1} parent=5 // pred_region
        // Predicated region
        $region21: #{tpu_custom_call.1} parent=19 // pred_check
          %p161 = pneg %p34
        $region22: #{tpu_custom_call.1} parent=19 // pred_check_branch
          %163 = sbr.rel (%p161) target = $region24
        $region23: #{tpu_custom_call.1} parent=19 // pred_region
          %s164 = smul.u32 16, %s14
          %p165 = scmp.lt.s32.totalorder %s164, 31
          %s166 = scalar_select %p165, %s164, 31
          %s167 = smul.addr %s166, 8
          %s168 = scalar_lea.vmem %s0, %s167
          %s169 = smul.u32 16, %s14
        $region24: #{tpu_custom_call.1} parent=19 // pred_fallthru
          _
        // Predicated region
        $region25: #{tpu_custom_call.1} parent=19 // pred_check
          %p170 = pneg %p81
        $region26: #{tpu_custom_call.1} parent=19 // pred_check_branch
          %172 = sbr.rel (%p170) target = $region28
        $region27: #{tpu_custom_call.1} parent=19 // pred_region
          %s173 = smul.u32 16, %s14
          %p174 = scmp.lt.s32.totalorder %s173, 31
          %s175 = scalar_select %p174, %s173, 31
          %s176 = smul.addr %s175, 8
          %s177 = scalar_lea.vmem %s2, %s176
          %s178 = smul.u32 16, %s14
        $region28: #{tpu_custom_call.1} parent=19 // pred_fallthru
          _
      $region20: #{tpu_custom_call.1} parent=5 // pred_fallthru
        _
      %p179 = scmp.le.s32.totalorder 1, %s14
      %p180 = scmp.lt.s32.totalorder %s14, 3
      %p181 = pnand %p179, %p180
      %p182 = pneg %p181
      // Predicated region
      $region29: #{tpu_custom_call.1} parent=5 // pred_check
        _
      $region30: #{tpu_custom_call.1} parent=5 // pred_check_branch
        %184 = sbr.rel (%p181) target = $region32
      $region31: #{tpu_custom_call.1} parent=5 // pred_region
        %s185 = ssub.s32 %s14, 1
        %s186 = smul.u32 16, %s19
        %p187 = scmp.lt.s32.totalorder %s186, 31
        %s188 = scalar_select %p187, %s186, 31
        %s189 = smul.addr %s188, 8
        %s190 = scalar_lea.vmem %s0, %s189
        %p191 = pneg %p40
        %p192 = pneg %p37
        %p193 = pneg %p61
        %p194 = pneg %p58
        %s195 = smul.u32 16, %s19
        %p196 = scmp.lt.s32.totalorder %s195, 31
        %s197 = scalar_select %p196, %s195, 31
        %s198 = smul.addr %s197, 8
        %s199 = scalar_lea.vmem %s2, %s198
        %p200 = pneg %p87
        %p201 = pneg %p84
        %p202 = pneg %p113
        %p203 = pneg %p110
        %s204 = smul.u32 16, %s19
        %p205 = scmp.lt.s32.totalorder %s204, 31
        %s206 = scalar_select %p205, %s204, 31
        %s207 = smul.addr %s206, 8
        %s208 = scalar_lea.vmem %s3, %s207
        %p209 = pneg %p139
        %p210 = pneg %p136
        %s211 = sand.u32 %s126, 1
        %s212 = scalar_lea.sflag [#allocation3], %s211
        %s213 = sand.u32 %s126, 1
        %s214 = smul.addr %s213, 8
        %s215 = scalar_lea.vmem [#allocation2], %s214
        %s216 = smul.u32 16, %s19
        %p217 = scmp.lt.s32.totalorder %s216, 31
        %s218 = scalar_select %p217, %s216, 31
        %s219 = smul.addr %s218, 8
        %s220 = scalar_lea.vmem %s0, %s219
        %s221 = smul.u32 16, %s19
        %s222 = smul.u32 16, %s19
        %p223 = scmp.lt.s32.totalorder %s222, 31
        %s224 = scalar_select %p223, %s222, 31
        %s225 = smul.addr %s224, 8
        %s226 = scalar_lea.vmem %s2, %s225
        %s227 = smul.u32 16, %s19
        %s228 = smul.u32 16, %s19
        %p229 = scmp.lt.s32.totalorder %s228, 31
        %s230 = scalar_select %p229, %s228, 31
        %s231 = smul.addr %s230, 8
        %s232 = scalar_lea.vmem %s3, %s231
        %s233 = smul.u32 16, %s19
        %v234 = vld [vmem:[%s220] sm:$0xff]
        %v235 = vld [vmem:[%s220 + $0x8] sm:$0xff]
        %v236 = vld [vmem:[%s220 + $0x10] sm:$0xff]
        %v237 = vld [vmem:[%s220 + $0x18] sm:$0xff]
        %v238 = vld [vmem:[%s220 + $0x20] sm:$0xff]
        %v239 = vld [vmem:[%s220 + $0x28] sm:$0xff]
        %v240 = vld [vmem:[%s220 + $0x30] sm:$0xff]
        %v241 = vld [vmem:[%s220 + $0x38] sm:$0xff]
        %v242 = vld [vmem:[%s220 + $0x40] sm:$0xff]
        %v243 = vld [vmem:[%s220 + $0x48] sm:$0xff]
        %v244 = vld [vmem:[%s220 + $0x50] sm:$0xff]
        %v245 = vld [vmem:[%s220 + $0x58] sm:$0xff]
        %v246 = vld [vmem:[%s220 + $0x60] sm:$0xff]
        %v247 = vld [vmem:[%s220 + $0x68] sm:$0xff]
        %v248 = vld [vmem:[%s220 + $0x70] sm:$0xff]
        %v249 = vld [vmem:[%s220 + $0x78] sm:$0xff]
        %v250 = vld [vmem:[%s1] sm:$0xff]
        %v251 = vld [vmem:[%s1 + $0x8] sm:$0xff]
        %v252 = vld [vmem:[%s1 + $0x10] sm:$0xff]
        %v253 = vld [vmem:[%s1 + $0x18] sm:$0xff]
        %vm254 = vcmask 261120
        %v256 = vsel %vm254, %v234, 0
        %v259 = vsel %vm254, %v235, 0
        %v262 = vsel %vm254, %v236, 0
        %v265 = vsel %vm254, %v237, 0
        %v268 = vsel %vm254, %v238, 0
        %v271 = vsel %vm254, %v239, 0
        %v274 = vsel %vm254, %v240, 0
        %v277 = vsel %vm254, %v241, 0
        %v280 = vsel %vm254, %v242, 0
        %v283 = vsel %vm254, %v243, 0
        %v286 = vsel %vm254, %v244, 0
        %v289 = vsel %vm254, %v245, 0
        %v292 = vsel %vm254, %v246, 0
        %v295 = vsel %vm254, %v247, 0
        %v298 = vsel %vm254, %v248, 0
        %v301 = vsel %vm254, %v249, 0
        %303 = vmatprep.subr.mxu0 0.0
        %304 = vmatpush1.msra.mxu0 0.0
        %305 = vmatprep.subr.mxu0 0.0
        %306 = vmatpush1.msra.mxu0 0.0
        %307 = vmatprep.subr.mxu0 0.0
        %308 = vmatpush1.msra.mxu0 0.0
        %309 = vmatprep.subr.mxu0 0.0
        %310 = vmatpush1.msra.mxu0 0.0
        %311 = vmatprep.subr.mxu0 0.0
        %312 = vmatpush1.msra.mxu0 0.0
        %313 = vmatprep.subr.mxu0 0.0
        %314 = vmatpush1.msra.mxu0 0.0
        %315 = vmatprep.subr.mxu0 0.0
        %316 = vmatpush1.msra.mxu0 0.0
        %317 = vmatprep.subr.mxu0 0.0
        %318 = vmatpush1.msra.mxu0 0.0
        %319 = vmatprep.subr.mxu0 0.0
        %320 = vmatpush1.msra.mxu0 0.0
        %321 = vmatprep.subr.mxu0 0.0
        %322 = vmatpush1.msra.mxu0 0.0
        %323 = vmatprep.subr.mxu0 0.0
        %324 = vmatpush1.msra.mxu0 0.0
        %325 = vmatprep.subr.mxu0 0.0
        %326 = vmatpush1.msra.mxu0 0.0
        %327 = vmatprep.subr.mxu0 0.0
        %328 = vmatpush1.msra.mxu0 %v253
        %329 = vmatprep.subr.mxu0 0.0
        %330 = vmatpush1.msra.mxu0 %v252
        %331 = vmatprep.subr.mxu0 0.0
        %332 = vmatpush1.msra.mxu0 %v251
        %333 = vmatprep.subr.mxu0 0.0
        %334 = vmatpush1.msra.mxu0 %v250
        %335 = vmatprep.subr.mxu0 0.0
        %336 = vmatpush2.msra.mxu0 0.0
        %337 = vmatprep.subr.mxu0 0.0
        %338 = vmatpush2.msra.mxu0 0.0
        %339 = vmatprep.subr.mxu0 0.0
        %340 = vmatpush2.msra.mxu0 0.0
        %341 = vmatprep.subr.mxu0 0.0
        %342 = vmatpush2.msra.mxu0 0.0
        %343 = vmatprep.subr.mxu0 0.0
        %344 = vmatpush2.msra.mxu0 0.0
        %345 = vmatprep.subr.mxu0 0.0
        %346 = vmatpush2.msra.mxu0 0.0
        %347 = vmatprep.subr.mxu0 0.0
        %348 = vmatpush2.msra.mxu0 0.0
        %349 = vmatprep.subr.mxu0 0.0
        %350 = vmatpush2.msra.mxu0 0.0
        %351 = vmatprep.subr.mxu0 0.0
        %352 = vmatpush2.msra.mxu0 0.0
        %353 = vmatprep.subr.mxu0 0.0
        %354 = vmatpush2.msra.mxu0 0.0
        %355 = vmatprep.subr.mxu0 0.0
        %356 = vmatpush2.msra.mxu0 0.0
        %357 = vmatprep.subr.mxu0 0.0
        %358 = vmatpush2.msra.mxu0 0.0
        %359 = vmatprep.subr.mxu0 0.0
        %360 = vmatpush2.msra.mxu0 0.0
        %361 = vmatprep.subr.mxu0 0.0
        %362 = vmatpush2.msra.mxu0 0.0
        %363 = vmatprep.subr.mxu0 0.0
        %364 = vmatpush2.msra.mxu0 0.0
        %365 = vmatprep.subr.mxu0 0.0
        %366 = vmatpush2.msra.mxu0 0.0
        %367 = vmatprep.mubr.f32.mxu0 0.0
        %368 = vmatmul.mubr.f32.gmra.mxu0 %v256
        %v369 = vpop.f32.mrf.mxu0
        %v370 = vadd.f32 0.0, %v369
        %v371 = vpop.f32.mrf.mxu0
        %372 = vmatprep.mubr.f32.mxu0 0.0
        %373 = vmatmul.mubr.f32.gmra.mxu0 %v259
        %v374 = vpop.f32.mrf.mxu0
        %v375 = vadd.f32 0.0, %v374
        %v376 = vpop.f32.mrf.mxu0
        %377 = vmatprep.mubr.f32.mxu0 0.0
        %378 = vmatmul.mubr.f32.gmra.mxu0 %v262
        %v379 = vpop.f32.mrf.mxu0
        %v380 = vadd.f32 0.0, %v379
        %v381 = vpop.f32.mrf.mxu0
        %382 = vmatprep.mubr.f32.mxu0 0.0
        %383 = vmatmul.mubr.f32.gmra.mxu0 %v265
        %v384 = vpop.f32.mrf.mxu0
        %v385 = vadd.f32 0.0, %v384
        %v386 = vpop.f32.mrf.mxu0
        %387 = vmatprep.mubr.f32.mxu0 0.0
        %388 = vmatmul.mubr.f32.gmra.mxu0 %v268
        %v389 = vpop.f32.mrf.mxu0
        %v390 = vadd.f32 0.0, %v389
        %v391 = vpop.f32.mrf.mxu0
        %392 = vmatprep.mubr.f32.mxu0 0.0
        %393 = vmatmul.mubr.f32.gmra.mxu0 %v271
        %v394 = vpop.f32.mrf.mxu0
        %v395 = vadd.f32 0.0, %v394
        %v396 = vpop.f32.mrf.mxu0
        %397 = vmatprep.mubr.f32.mxu0 0.0
        %398 = vmatmul.mubr.f32.gmra.mxu0 %v274
        %v399 = vpop.f32.mrf.mxu0
        %v400 = vadd.f32 0.0, %v399
        %v401 = vpop.f32.mrf.mxu0
        %402 = vmatprep.mubr.f32.mxu0 0.0
        %403 = vmatmul.mubr.f32.gmra.mxu0 %v277
        %v404 = vpop.f32.mrf.mxu0
        %v405 = vadd.f32 0.0, %v404
        %v406 = vpop.f32.mrf.mxu0
        %407 = vmatprep.mubr.f32.mxu0 0.0
        %408 = vmatmul.mubr.f32.gmra.mxu0 %v280
        %v409 = vpop.f32.mrf.mxu0
        %v410 = vadd.f32 0.0, %v409
        %v411 = vpop.f32.mrf.mxu0
        %412 = vmatprep.mubr.f32.mxu0 0.0
        %413 = vmatmul.mubr.f32.gmra.mxu0 %v283
        %v414 = vpop.f32.mrf.mxu0
        %v415 = vadd.f32 0.0, %v414
        %v416 = vpop.f32.mrf.mxu0
        %417 = vmatprep.mubr.f32.mxu0 0.0
        %418 = vmatmul.mubr.f32.gmra.mxu0 %v286
        %v419 = vpop.f32.mrf.mxu0
        %v420 = vadd.f32 0.0, %v419
        %v421 = vpop.f32.mrf.mxu0
        %422 = vmatprep.mubr.f32.mxu0 0.0
        %423 = vmatmul.mubr.f32.gmra.mxu0 %v289
        %v424 = vpop.f32.mrf.mxu0
        %v425 = vadd.f32 0.0, %v424
        %v426 = vpop.f32.mrf.mxu0
        %427 = vmatprep.mubr.f32.mxu0 0.0
        %428 = vmatmul.mubr.f32.gmra.mxu0 %v292
        %v429 = vpop.f32.mrf.mxu0
        %v430 = vadd.f32 0.0, %v429
        %v431 = vpop.f32.mrf.mxu0
        %432 = vmatprep.mubr.f32.mxu0 0.0
        %433 = vmatmul.mubr.f32.gmra.mxu0 %v295
        %v434 = vpop.f32.mrf.mxu0
        %v435 = vadd.f32 0.0, %v434
        %v436 = vpop.f32.mrf.mxu0
        %437 = vmatprep.mubr.f32.mxu0 0.0
        %438 = vmatmul.mubr.f32.gmra.mxu0 %v298
        %v439 = vpop.f32.mrf.mxu0
        %v440 = vadd.f32 0.0, %v439
        %v441 = vpop.f32.mrf.mxu0
        %442 = vmatprep.mubr.f32.mxu0 0.0
        %443 = vmatmul.mubr.f32.gmra.mxu0 %v301
        %v444 = vpop.f32.mrf.mxu0
        %v445 = vadd.f32 0.0, %v444
        %v446 = vpop.f32.mrf.mxu0
        %447 = vdwg.mxu0
        %vm448 = vcmask 130048
        %449 = vst.msk [vmem:[%s232] sm:$0xff] %vm448, %v370
        %450 = vst.msk [vmem:[%s232 + $0x8] sm:$0xff] %vm448, %v375
        %451 = vst.msk [vmem:[%s232 + $0x10] sm:$0xff] %vm448, %v380
        %452 = vst.msk [vmem:[%s232 + $0x18] sm:$0xff] %vm448, %v385
        %453 = vst.msk [vmem:[%s232 + $0x20] sm:$0xff] %vm448, %v390
        %454 = vst.msk [vmem:[%s232 + $0x28] sm:$0xff] %vm448, %v395
        %455 = vst.msk [vmem:[%s232 + $0x30] sm:$0xff] %vm448, %v400
        %456 = vst.msk [vmem:[%s232 + $0x38] sm:$0xff] %vm448, %v405
        %457 = vst.msk [vmem:[%s232 + $0x40] sm:$0xff] %vm448, %v410
        %458 = vst.msk [vmem:[%s232 + $0x48] sm:$0xff] %vm448, %v415
        %459 = vst.msk [vmem:[%s232 + $0x50] sm:$0xff] %vm448, %v420
        %460 = vst.msk [vmem:[%s232 + $0x58] sm:$0xff] %vm448, %v425
        %461 = vst.msk [vmem:[%s232 + $0x60] sm:$0xff] %vm448, %v430
        %462 = vst.msk [vmem:[%s232 + $0x68] sm:$0xff] %vm448, %v435
        %463 = vst.msk [vmem:[%s232 + $0x70] sm:$0xff] %vm448, %v440
        %464 = vst.msk [vmem:[%s232 + $0x78] sm:$0xff] %vm448, %v445
        %v465 = vsel %vm448, %v370, -inf
        %466 = vmax.xlane.f32.xlu0 %v465
        %v467 = vpop.xlane.xlu0 %466
        %v468 = vsel %vm448, %v375, -inf
        %469 = vmax.xlane.f32.xlu0 %v468
        %v470 = vpop.xlane.xlu0 %469
        %v471 = vsel %vm448, %v380, -inf
        %472 = vmax.xlane.f32.xlu0 %v471
        %v473 = vpop.xlane.xlu0 %472
        %v474 = vsel %vm448, %v385, -inf
        %475 = vmax.xlane.f32.xlu0 %v474
        %v476 = vpop.xlane.xlu0 %475
        %v477 = vsel %vm448, %v390, -inf
        %478 = vmax.xlane.f32.xlu0 %v477
        %v479 = vpop.xlane.xlu0 %478
        %v480 = vsel %vm448, %v395, -inf
        %481 = vmax.xlane.f32.xlu0 %v480
        %v482 = vpop.xlane.xlu0 %481
        %v483 = vsel %vm448, %v400, -inf
        %484 = vmax.xlane.f32.xlu0 %v483
        %v485 = vpop.xlane.xlu0 %484
        %v486 = vsel %vm448, %v405, -inf
        %487 = vmax.xlane.f32.xlu0 %v486
        %v488 = vpop.xlane.xlu0 %487
        %v489 = vsel %vm448, %v410, -inf
        %490 = vmax.xlane.f32.xlu0 %v489
        %v491 = vpop.xlane.xlu0 %490
        %v492 = vsel %vm448, %v415, -inf
        %493 = vmax.xlane.f32.xlu0 %v492
        %v494 = vpop.xlane.xlu0 %493
        %v495 = vsel %vm448, %v420, -inf
        %496 = vmax.xlane.f32.xlu0 %v495
        %v497 = vpop.xlane.xlu0 %496
        %v498 = vsel %vm448, %v425, -inf
        %499 = vmax.xlane.f32.xlu0 %v498
        %v500 = vpop.xlane.xlu0 %499
        %v501 = vsel %vm448, %v430, -inf
        %502 = vmax.xlane.f32.xlu0 %v501
        %v503 = vpop.xlane.xlu0 %502
        %v504 = vsel %vm448, %v435, -inf
        %505 = vmax.xlane.f32.xlu0 %v504
        %v506 = vpop.xlane.xlu0 %505
        %v507 = vsel %vm448, %v440, -inf
        %508 = vmax.xlane.f32.xlu0 %v507
        %v509 = vpop.xlane.xlu0 %508
        %v510 = vsel %vm448, %v445, -inf
        %511 = vmax.xlane.f32.xlu0 %v510
        %v512 = vpop.xlane.xlu0 %511
        %v513 = vsub.f32 %v370, %v467
        %v514 = vsub.f32 %v375, %v470
        %v515 = vsub.f32 %v380, %v473
        %v516 = vsub.f32 %v385, %v476
        %v517 = vsub.f32 %v390, %v479
        %v518 = vsub.f32 %v395, %v482
        %v519 = vsub.f32 %v400, %v485
        %v520 = vsub.f32 %v405, %v488
        %v521 = vsub.f32 %v410, %v491
        %v522 = vsub.f32 %v415, %v494
        %v523 = vsub.f32 %v420, %v497
        %v524 = vsub.f32 %v425, %v500
        %v525 = vsub.f32 %v430, %v503
        %v526 = vsub.f32 %v435, %v506
        %v527 = vsub.f32 %v440, %v509
        %v528 = vsub.f32 %v445, %v512
        %v529 = vmul.f32 %v513, 1.442695
        %v530 = vpow.pop %v529
        %v531 = vmul.f32 %v514, 1.442695
        %v532 = vpow.pop %v531
        %v533 = vmul.f32 %v515, 1.442695
        %v534 = vpow.pop %v533
        %v535 = vmul.f32 %v516, 1.442695
        %v536 = vpow.pop %v535
        %v537 = vmul.f32 %v517, 1.442695
        %v538 = vpow.pop %v537
        %v539 = vmul.f32 %v518, 1.442695
        %v540 = vpow.pop %v539
        %v541 = vmul.f32 %v519, 1.442695
        %v542 = vpow.pop %v541
        %v543 = vmul.f32 %v520, 1.442695
        %v544 = vpow.pop %v543
        %v545 = vmul.f32 %v521, 1.442695
        %v546 = vpow.pop %v545
        %v547 = vmul.f32 %v522, 1.442695
        %v548 = vpow.pop %v547
        %v549 = vmul.f32 %v523, 1.442695
        %v550 = vpow.pop %v549
        %v551 = vmul.f32 %v524, 1.442695
        %v552 = vpow.pop %v551
        %v553 = vmul.f32 %v525, 1.442695
        %v554 = vpow.pop %v553
        %v555 = vmul.f32 %v526, 1.442695
        %v556 = vpow.pop %v555
        %v557 = vmul.f32 %v527, 1.442695
        %v558 = vpow.pop %v557
        %v559 = vmul.f32 %v528, 1.442695
        %v560 = vpow.pop %v559
        %v561 = vsel %vm448, %v530, 0.0
        %562 = vadd.xlane.f32.xlu0 %v561
        %v563 = vpop.xlane.xlu0 %562
        %v564 = vsel %vm448, %v532, 0.0
        %565 = vadd.xlane.f32.xlu0 %v564
        %v566 = vpop.xlane.xlu0 %565
        %v567 = vsel %vm448, %v534, 0.0
        %568 = vadd.xlane.f32.xlu0 %v567
        %v569 = vpop.xlane.xlu0 %568
        %v570 = vsel %vm448, %v536, 0.0
        %571 = vadd.xlane.f32.xlu0 %v570
        %v572 = vpop.xlane.xlu0 %571
        %v573 = vsel %vm448, %v538, 0.0
        %574 = vadd.xlane.f32.xlu0 %v573
        %v575 = vpop.xlane.xlu0 %574
        %v576 = vsel %vm448, %v540, 0.0
        %577 = vadd.xlane.f32.xlu0 %v576
        %v578 = vpop.xlane.xlu0 %577
        %v579 = vsel %vm448, %v542, 0.0
        %580 = vadd.xlane.f32.xlu0 %v579
        %v581 = vpop.xlane.xlu0 %580
        %v582 = vsel %vm448, %v544, 0.0
        %583 = vadd.xlane.f32.xlu0 %v582
        %v584 = vpop.xlane.xlu0 %583
        %v585 = vsel %vm448, %v546, 0.0
        %586 = vadd.xlane.f32.xlu0 %v585
        %v587 = vpop.xlane.xlu0 %586
        %v588 = vsel %vm448, %v548, 0.0
        %589 = vadd.xlane.f32.xlu0 %v588
        %v590 = vpop.xlane.xlu0 %589
        %v591 = vsel %vm448, %v550, 0.0
        %592 = vadd.xlane.f32.xlu0 %v591
        %v593 = vpop.xlane.xlu0 %592
        %v594 = vsel %vm448, %v552, 0.0
        %595 = vadd.xlane.f32.xlu0 %v594
        %v596 = vpop.xlane.xlu0 %595
        %v597 = vsel %vm448, %v554, 0.0
        %598 = vadd.xlane.f32.xlu0 %v597
        %v599 = vpop.xlane.xlu0 %598
        %v600 = vsel %vm448, %v556, 0.0
        %601 = vadd.xlane.f32.xlu0 %v600
        %v602 = vpop.xlane.xlu0 %601
        %v603 = vsel %vm448, %v558, 0.0
        %604 = vadd.xlane.f32.xlu0 %v603
        %v605 = vpop.xlane.xlu0 %604
        %v606 = vsel %vm448, %v560, 0.0
        %607 = vadd.xlane.f32.xlu0 %v606
        %v608 = vpop.xlane.xlu0 %607
        %v609 = vlog2.pop %v563
        %v610 = vmul.f32 %v609, 0.6931472
        %v611 = vlog2.pop %v566
        %v612 = vmul.f32 %v611, 0.6931472
        %v613 = vlog2.pop %v569
        %v614 = vmul.f32 %v613, 0.6931472
        %v615 = vlog2.pop %v572
        %v616 = vmul.f32 %v615, 0.6931472
        %v617 = vlog2.pop %v575
        %v618 = vmul.f32 %v617, 0.6931472
        %v619 = vlog2.pop %v578
        %v620 = vmul.f32 %v619, 0.6931472
        %v621 = vlog2.pop %v581
        %v622 = vmul.f32 %v621, 0.6931472
        %v623 = vlog2.pop %v584
        %v624 = vmul.f32 %v623, 0.6931472
        %v625 = vlog2.pop %v587
        %v626 = vmul.f32 %v625, 0.6931472
        %v627 = vlog2.pop %v590
        %v628 = vmul.f32 %v627, 0.6931472
        %v629 = vlog2.pop %v593
        %v630 = vmul.f32 %v629, 0.6931472
        %v631 = vlog2.pop %v596
        %v632 = vmul.f32 %v631, 0.6931472
        %v633 = vlog2.pop %v599
        %v634 = vmul.f32 %v633, 0.6931472
        %v635 = vlog2.pop %v602
        %v636 = vmul.f32 %v635, 0.6931472
        %v637 = vlog2.pop %v605
        %v638 = vmul.f32 %v637, 0.6931472
        %v639 = vlog2.pop %v608
        %v640 = vmul.f32 %v639, 0.6931472
        %v641 = vadd.f32 %v467, %v610
        %v642 = vadd.f32 %v470, %v612
        %v643 = vadd.f32 %v473, %v614
        %v644 = vadd.f32 %v476, %v616
        %v645 = vadd.f32 %v479, %v618
        %v646 = vadd.f32 %v482, %v620
        %v647 = vadd.f32 %v485, %v622
        %v648 = vadd.f32 %v488, %v624
        %v649 = vadd.f32 %v491, %v626
        %v650 = vadd.f32 %v494, %v628
        %v651 = vadd.f32 %v497, %v630
        %v652 = vadd.f32 %v500, %v632
        %v653 = vadd.f32 %v503, %v634
        %v654 = vadd.f32 %v506, %v636
        %v655 = vadd.f32 %v509, %v638
        %v656 = vadd.f32 %v512, %v640
        %v657 = vlaneseq
        %v658 = vand.u32 %v657, 127
        %v659 = vld [vmem:[%s226] sm:$0xff]
        %v660 = vld [vmem:[%s226 + $0x8] sm:$0xff]
        %v661 = vld [vmem:[%s226 + $0x10] sm:$0xff]
        %v662 = vld [vmem:[%s226 + $0x18] sm:$0xff]
        %v663 = vld [vmem:[%s226 + $0x20] sm:$0xff]
        %v664 = vld [vmem:[%s226 + $0x28] sm:$0xff]
        %v665 = vld [vmem:[%s226 + $0x30] sm:$0xff]
        %v666 = vld [vmem:[%s226 + $0x38] sm:$0xff]
        %v667 = vld [vmem:[%s226 + $0x40] sm:$0xff]
        %v668 = vld [vmem:[%s226 + $0x48] sm:$0xff]
        %v669 = vld [vmem:[%s226 + $0x50] sm:$0xff]
        %v670 = vld [vmem:[%s226 + $0x58] sm:$0xff]
        %v671 = vld [vmem:[%s226 + $0x60] sm:$0xff]
        %v672 = vld [vmem:[%s226 + $0x68] sm:$0xff]
        %v673 = vld [vmem:[%s226 + $0x70] sm:$0xff]
        %v674 = vld [vmem:[%s226 + $0x78] sm:$0xff]
        %675 = vset.pattern.permute.xlu0 0
        %676 = vperm.xlu0 %675, %v659
        %v677 = vpop.permute.xlu0 %676
        %678 = vset.pattern.permute.xlu0 0
        %679 = vperm.xlu0 %678, %v660
        %v680 = vpop.permute.xlu0 %679
        %681 = vset.pattern.permute.xlu0 0
        %682 = vperm.xlu0 %681, %v661
        %v683 = vpop.permute.xlu0 %682
        %684 = vset.pattern.permute.xlu0 0
        %685 = vperm.xlu0 %684, %v662
        %v686 = vpop.permute.xlu0 %685
        %687 = vset.pattern.permute.xlu0 0
        %688 = vperm.xlu0 %687, %v663
        %v689 = vpop.permute.xlu0 %688
        %690 = vset.pattern.permute.xlu0 0
        %691 = vperm.xlu0 %690, %v664
        %v692 = vpop.permute.xlu0 %691
        %693 = vset.pattern.permute.xlu0 0
        %694 = vperm.xlu0 %693, %v665
        %v695 = vpop.permute.xlu0 %694
        %696 = vset.pattern.permute.xlu0 0
        %697 = vperm.xlu0 %696, %v666
        %v698 = vpop.permute.xlu0 %697
        %699 = vset.pattern.permute.xlu0 0
        %700 = vperm.xlu0 %699, %v667
        %v701 = vpop.permute.xlu0 %700
        %702 = vset.pattern.permute.xlu0 0
        %703 = vperm.xlu0 %702, %v668
        %v704 = vpop.permute.xlu0 %703
        %705 = vset.pattern.permute.xlu0 0
        %706 = vperm.xlu0 %705, %v669
        %v707 = vpop.permute.xlu0 %706
        %708 = vset.pattern.permute.xlu0 0
        %709 = vperm.xlu0 %708, %v670
        %v710 = vpop.permute.xlu0 %709
        %711 = vset.pattern.permute.xlu0 0
        %712 = vperm.xlu0 %711, %v671
        %v713 = vpop.permute.xlu0 %712
        %714 = vset.pattern.permute.xlu0 0
        %715 = vperm.xlu0 %714, %v672
        %v716 = vpop.permute.xlu0 %715
        %717 = vset.pattern.permute.xlu0 0
        %718 = vperm.xlu0 %717, %v673
        %v719 = vpop.permute.xlu0 %718
        %720 = vset.pattern.permute.xlu0 0
        %721 = vperm.xlu0 %720, %v674
        %v722 = vpop.permute.xlu0 %721
        %vm723 = vcmp.eq.s32.totalorder %v658, %v677
        %vm724 = vcmp.eq.s32.totalorder %v658, %v680
        %vm725 = vcmp.eq.s32.totalorder %v658, %v683
        %vm726 = vcmp.eq.s32.totalorder %v658, %v686
        %vm727 = vcmp.eq.s32.totalorder %v658, %v689
        %vm728 = vcmp.eq.s32.totalorder %v658, %v692
        %vm729 = vcmp.eq.s32.totalorder %v658, %v695
        %vm730 = vcmp.eq.s32.totalorder %v658, %v698
        %vm731 = vcmp.eq.s32.totalorder %v658, %v701
        %vm732 = vcmp.eq.s32.totalorder %v658, %v704
        %vm733 = vcmp.eq.s32.totalorder %v658, %v707
        %vm734 = vcmp.eq.s32.totalorder %v658, %v710
        %vm735 = vcmp.eq.s32.totalorder %v658, %v713
        %vm736 = vcmp.eq.s32.totalorder %v658, %v716
        %vm737 = vcmp.eq.s32.totalorder %v658, %v719
        %vm738 = vcmp.eq.s32.totalorder %v658, %v722
        %v739 = vsel %vm723, 1, 0
        %v740 = vsel %vm724, 1, 0
        %v741 = vsel %vm725, 1, 0
        %v742 = vsel %vm726, 1, 0
        %v743 = vsel %vm727, 1, 0
        %v744 = vsel %vm728, 1, 0
        %v745 = vsel %vm729, 1, 0
        %v746 = vsel %vm730, 1, 0
        %v747 = vsel %vm731, 1, 0
        %v748 = vsel %vm732, 1, 0
        %v749 = vsel %vm733, 1, 0
        %v750 = vsel %vm734, 1, 0
        %v751 = vsel %vm735, 1, 0
        %v752 = vsel %vm736, 1, 0
        %v753 = vsel %vm737, 1, 0
        %v754 = vsel %vm738, 1, 0
        %v755 = vcvt.s32.f32 %v739
        %v756 = vcvt.s32.f32 %v740
        %v757 = vcvt.s32.f32 %v741
        %v758 = vcvt.s32.f32 %v742
        %v759 = vcvt.s32.f32 %v743
        %v760 = vcvt.s32.f32 %v744
        %v761 = vcvt.s32.f32 %v745
        %v762 = vcvt.s32.f32 %v746
        %v763 = vcvt.s32.f32 %v747
        %v764 = vcvt.s32.f32 %v748
        %v765 = vcvt.s32.f32 %v749
        %v766 = vcvt.s32.f32 %v750
        %v767 = vcvt.s32.f32 %v751
        %v768 = vcvt.s32.f32 %v752
        %v769 = vcvt.s32.f32 %v753
        %v770 = vcvt.s32.f32 %v754
        %v771 = vmul.f32 %v370, %v755
        %v772 = vmul.f32 %v375, %v756
        %v773 = vmul.f32 %v380, %v757
        %v774 = vmul.f32 %v385, %v758
        %v775 = vmul.f32 %v390, %v759
        %v776 = vmul.f32 %v395, %v760
        %v777 = vmul.f32 %v400, %v761
        %v778 = vmul.f32 %v405, %v762
        %v779 = vmul.f32 %v410, %v763
        %v780 = vmul.f32 %v415, %v764
        %v781 = vmul.f32 %v420, %v765
        %v782 = vmul.f32 %v425, %v766
        %v783 = vmul.f32 %v430, %v767
        %v784 = vmul.f32 %v435, %v768
        %v785 = vmul.f32 %v440, %v769
        %v786 = vmul.f32 %v445, %v770
        %v787 = vsel %vm448, %v771, 0.0
        %788 = vadd.xlane.f32.xlu0 %v787
        %v789 = vpop.xlane.xlu0 %788
        %v790 = vsel %vm448, %v772, 0.0
        %791 = vadd.xlane.f32.xlu0 %v790
        %v792 = vpop.xlane.xlu0 %791
        %v793 = vsel %vm448, %v773, 0.0
        %794 = vadd.xlane.f32.xlu0 %v793
        %v795 = vpop.xlane.xlu0 %794
        %v796 = vsel %vm448, %v774, 0.0
        %797 = vadd.xlane.f32.xlu0 %v796
        %v798 = vpop.xlane.xlu0 %797
        %v799 = vsel %vm448, %v775, 0.0
        %800 = vadd.xlane.f32.xlu0 %v799
        %v801 = vpop.xlane.xlu0 %800
        %v802 = vsel %vm448, %v776, 0.0
        %803 = vadd.xlane.f32.xlu0 %v802
        %v804 = vpop.xlane.xlu0 %803
        %v805 = vsel %vm448, %v777, 0.0
        %806 = vadd.xlane.f32.xlu0 %v805
        %v807 = vpop.xlane.xlu0 %806
        %v808 = vsel %vm448, %v778, 0.0
        %809 = vadd.xlane.f32.xlu0 %v808
        %v810 = vpop.xlane.xlu0 %809
        %v811 = vsel %vm448, %v779, 0.0
        %812 = vadd.xlane.f32.xlu0 %v811
        %v813 = vpop.xlane.xlu0 %812
        %v814 = vsel %vm448, %v780, 0.0
        %815 = vadd.xlane.f32.xlu0 %v814
        %v816 = vpop.xlane.xlu0 %815
        %v817 = vsel %vm448, %v781, 0.0
        %818 = vadd.xlane.f32.xlu0 %v817
        %v819 = vpop.xlane.xlu0 %818
        %v820 = vsel %vm448, %v782, 0.0
        %821 = vadd.xlane.f32.xlu0 %v820
        %v822 = vpop.xlane.xlu0 %821
        %v823 = vsel %vm448, %v783, 0.0
        %824 = vadd.xlane.f32.xlu0 %v823
        %v825 = vpop.xlane.xlu0 %824
        %v826 = vsel %vm448, %v784, 0.0
        %827 = vadd.xlane.f32.xlu0 %v826
        %v828 = vpop.xlane.xlu0 %827
        %v829 = vsel %vm448, %v785, 0.0
        %830 = vadd.xlane.f32.xlu0 %v829
        %v831 = vpop.xlane.xlu0 %830
        %v832 = vsel %vm448, %v786, 0.0
        %833 = vadd.xlane.f32.xlu0 %v832
        %v834 = vpop.xlane.xlu0 %833
        %v835 = vsub.f32 %v641, %v789
        %v836 = vsub.f32 %v642, %v792
        %v837 = vsub.f32 %v643, %v795
        %v838 = vsub.f32 %v644, %v798
        %v839 = vsub.f32 %v645, %v801
        %v840 = vsub.f32 %v646, %v804
        %v841 = vsub.f32 %v647, %v807
        %v842 = vsub.f32 %v648, %v810
        %v843 = vsub.f32 %v649, %v813
        %v844 = vsub.f32 %v650, %v816
        %v845 = vsub.f32 %v651, %v819
        %v846 = vsub.f32 %v652, %v822
        %v847 = vsub.f32 %v653, %v825
        %v848 = vsub.f32 %v654, %v828
        %v849 = vsub.f32 %v655, %v831
        %v850 = vsub.f32 %v656, %v834
        %s851 = smul.u32 %s19, 128
        %v852 = vlaneseq
        %v853 = vshrl.u32 %v852, 7
        %v854 = vadd.s32 %v853, 8
        %v855 = vadd.s32 %v853, 16
        %v856 = vadd.s32 %v853, 24
        %v857 = vadd.s32 %v853, 32
        %v858 = vadd.s32 %v853, 40
        %v859 = vadd.s32 %v853, 48
        %v860 = vadd.s32 %v853, 56
        %v861 = vadd.s32 %v853, 64
        %v862 = vadd.s32 %v853, 72
        %v863 = vadd.s32 %v853, 80
        %v864 = vadd.s32 %v853, 88
        %v865 = vadd.s32 %v853, 96
        %v866 = vadd.s32 %v853, 104
        %v867 = vadd.s32 %v853, 112
        %v868 = vadd.s32 %v853, 120
        %v869 = vstv %s851
        %v870 = vadd.s32 %v869, %v853
        %v871 = vadd.s32 %v869, %v854
        %v872 = vadd.s32 %v869, %v855
        %v873 = vadd.s32 %v869, %v856
        %v874 = vadd.s32 %v869, %v857
        %v875 = vadd.s32 %v869, %v858
        %v876 = vadd.s32 %v869, %v859
        %v877 = vadd.s32 %v869, %v860
        %v878 = vadd.s32 %v869, %v861
        %v879 = vadd.s32 %v869, %v862
        %v880 = vadd.s32 %v869, %v863
        %v881 = vadd.s32 %v869, %v864
        %v882 = vadd.s32 %v869, %v865
        %v883 = vadd.s32 %v869, %v866
        %v884 = vadd.s32 %v869, %v867
        %v885 = vadd.s32 %v869, %v868
        %vm886 = vcmp.lt.s32.totalorder %v870, 256
        %vm887 = vcmp.lt.s32.totalorder %v871, 256
        %vm888 = vcmp.lt.s32.totalorder %v872, 256
        %vm889 = vcmp.lt.s32.totalorder %v873, 256
        %vm890 = vcmp.lt.s32.totalorder %v874, 256
        %vm891 = vcmp.lt.s32.totalorder %v875, 256
        %vm892 = vcmp.lt.s32.totalorder %v876, 256
        %vm893 = vcmp.lt.s32.totalorder %v877, 256
        %vm894 = vcmp.lt.s32.totalorder %v878, 256
        %vm895 = vcmp.lt.s32.totalorder %v879, 256
        %vm896 = vcmp.lt.s32.totalorder %v880, 256
        %vm897 = vcmp.lt.s32.totalorder %v881, 256
        %vm898 = vcmp.lt.s32.totalorder %v882, 256
        %vm899 = vcmp.lt.s32.totalorder %v883, 256
        %vm900 = vcmp.lt.s32.totalorder %v884, 256
        %vm901 = vcmp.lt.s32.totalorder %v885, 256
        %v902 = vsel %vm886, %v835, 0.0
        %v903 = vsel %vm887, %v836, 0.0
        %v904 = vsel %vm888, %v837, 0.0
        %v905 = vsel %vm889, %v838, 0.0
        %v906 = vsel %vm890, %v839, 0.0
        %v907 = vsel %vm891, %v840, 0.0
        %v908 = vsel %vm892, %v841, 0.0
        %v909 = vsel %vm893, %v842, 0.0
        %v910 = vsel %vm894, %v843, 0.0
        %v911 = vsel %vm895, %v844, 0.0
        %v912 = vsel %vm896, %v845, 0.0
        %v913 = vsel %vm897, %v846, 0.0
        %v914 = vsel %vm898, %v847, 0.0
        %v915 = vsel %vm899, %v848, 0.0
        %v916 = vsel %vm900, %v849, 0.0
        %v917 = vsel %vm901, %v850, 0.0
        %vm918 = vcmask 7168
        %v919 = vsel %vm918, %v902, 0.0
        %v920 = vsel %vm918, %v903, 0.0
        %v921 = vadd.f32 %v919, %v920
        %v922 = vsel %vm918, %v904, 0.0
        %v923 = vadd.f32 %v921, %v922
        %v924 = vsel %vm918, %v905, 0.0
        %v925 = vadd.f32 %v923, %v924
        %v926 = vsel %vm918, %v906, 0.0
        %v927 = vadd.f32 %v925, %v926
        %v928 = vsel %vm918, %v907, 0.0
        %v929 = vadd.f32 %v927, %v928
        %v930 = vsel %vm918, %v908, 0.0
        %v931 = vadd.f32 %v929, %v930
        %v932 = vsel %vm918, %v909, 0.0
        %v933 = vadd.f32 %v931, %v932
        %v934 = vsel %vm918, %v910, 0.0
        %v935 = vadd.f32 %v933, %v934
        %v936 = vsel %vm918, %v911, 0.0
        %v937 = vadd.f32 %v935, %v936
        %v938 = vsel %vm918, %v912, 0.0
        %v939 = vadd.f32 %v937, %v938
        %v940 = vsel %vm918, %v913, 0.0
        %v941 = vadd.f32 %v939, %v940
        %v942 = vsel %vm918, %v914, 0.0
        %v943 = vadd.f32 %v941, %v942
        %v944 = vsel %vm918, %v915, 0.0
        %v945 = vadd.f32 %v943, %v944
        %v946 = vsel %vm918, %v916, 0.0
        %v947 = vadd.f32 %v945, %v946
        %v948 = vsel %vm918, %v917, 0.0
        %v949 = vadd.f32 %v947, %v948
        %950 = vadd.xlane.f32.xlu0 %v949
        %v951 = vpop.xlane.xlu0 %950
        %v952 = vrot.slane %v951, 4
        %v953 = vadd.f32 %v951, %v952
        %v954 = vrot.slane %v953, 2
        %v955 = vadd.f32 %v953, %v954
        %v956 = vrot.slane %v955, 1
        %v957 = vadd.f32 %v955, %v956
        %s958 = vtos %v957
        %v959 = vstv %s958
        %960 = vst [vmem:[%s215] sm:$0xff] %v959
        %s961 = smul.u32 16, %s19
        %p962 = scmp.lt.s32.totalorder %s961, 31
        %s963 = scalar_select %p962, %s961, 31
        %s964 = smul.addr %s963, 8
        %s965 = scalar_lea.vmem %s3, %s964
        %s966 = sand.u32 %s126, 1
        %s967 = scalar_lea.sflag [#allocation3], %s966
        %s968 = sand.u32 %s126, 1
        %s969 = smul.addr %s968, 8
        %s970 = scalar_lea.vmem [#allocation2], %s969
        // Predicated region
        $region33: #{tpu_custom_call.1} parent=31 // pred_check
          %p971 = pneg %p110
        $region34: #{tpu_custom_call.1} parent=31 // pred_check_branch
          %973 = sbr.rel (%p971) target = $region36
        $region35: #{tpu_custom_call.1} parent=31 // pred_region
          %s974 = smul.u32 16, %s19
        $region36: #{tpu_custom_call.1} parent=31 // pred_fallthru
          _
        // Predicated region
        $region37: #{tpu_custom_call.1} parent=31 // pred_check
          %p975 = pneg %p136
        $region38: #{tpu_custom_call.1} parent=31 // pred_check_branch
          %977 = sbr.rel (%p975) target = $region40
        $region39: #{tpu_custom_call.1} parent=31 // pred_region
          %s979 = ssub.s32 128, 128
          %980 = vsyncadd %s967, %s979
          %s981 = smul.addr %s19, 128
          %s982 = scalar_lea.hbm %s4, %s981
          %s984 = sshll.u32 %s970, 4
          %s985 = int_to_ptr.vmem [resolvable:$true] %s984
          %987 = dma.vmem_to_hbm [thread:$0]  %s985, 128, %s982, %s967
        $region40: #{tpu_custom_call.1} parent=31 // pred_fallthru
          _
      $region32: #{tpu_custom_call.1} parent=5 // pred_fallthru
        _
      %p988 = scmp.le.s32.totalorder 2, %s14
      // Predicated region
      $region41: #{tpu_custom_call.1} parent=5 // pred_check
        %p989 = pneg %p988
      $region42: #{tpu_custom_call.1} parent=5 // pred_check_branch
        %991 = sbr.rel (%p989) target = $region44
      $region43: #{tpu_custom_call.1} parent=5 // pred_region
        %s992 = ssub.s32 %s14, 2
        // Predicated region
        $region45: #{tpu_custom_call.1} parent=43 // pred_check
          %p993 = pneg %p116
        $region46: #{tpu_custom_call.1} parent=43 // pred_check_branch
          %995 = sbr.rel (%p993) target = $region48
        $region47: #{tpu_custom_call.1} parent=43 // pred_region
          %s996 = smul.u32 16, %s20
          %p997 = scmp.lt.s32.totalorder %s996, 31
          %s998 = scalar_select %p997, %s996, 31
          %s999 = smul.addr %s998, 8
          %s1000 = scalar_lea.vmem %s3, %s999
        $region48: #{tpu_custom_call.1} parent=43 // pred_fallthru
          _
        // Predicated region
        $region49: #{tpu_custom_call.1} parent=43 // pred_check
          %p1001 = pneg %p142
        $region50: #{tpu_custom_call.1} parent=43 // pred_check_branch
          %1003 = sbr.rel (%p1001) target = $region52
        $region51: #{tpu_custom_call.1} parent=43 // pred_region
          %s1004 = sand.u32 %s127, 1
          %s1005 = scalar_lea.sflag [#allocation3], %s1004
          %s1006 = sand.u32 %s127, 1
          %s1007 = smul.addr %s1006, 8
          %s1008 = scalar_lea.vmem [#allocation2], %s1007
          %1009 = dma.done %s1005, 128
        $region52: #{tpu_custom_call.1} parent=43 // pred_fallthru
          _
      $region44: #{tpu_custom_call.1} parent=5 // pred_fallthru
        _
    $region6: #{tpu_custom_call.1} parent=1 // loop_footer
      %s18 = sadd.s32 1, %s14
    $region7: #{tpu_custom_call.1} parent=1 // loop_footer_branch
      %13 = sbr.rel target = $region3
    $region8: #{tpu_custom_call.1} parent=1 // loop_exit
      _
    %1010 = vsyncpa [#allocation3], 1
    %s1011 = scalar_lea.sflag [#allocation3], 1
    %1012 = vsyncpa %s1011, 1

</llo_original>
